<compile_context>
chip_gen: v7x
topology: tpu7x:2x2x1
jax: 0.10.0
libtpu: 0.0.40
codegen_flags: <defaults>
</compile_context>

<pallas_src>
import jax
import jax.numpy as jnp
from jax.experimental import pallas as pl
from jax.experimental.pallas import tpu as pltpu

LORA_R = 32


def _round_up(x, m):
    return ((x + m - 1) // m) * m


# -----------------------------------------------------------------------------
# Kernel
# -----------------------------------------------------------------------------
def _mlp_lora_kernel(h_ref, w13k_ref, a13w_ref, w2f_ref, w2bp_ref,
                     out_ref, lhs_ref, acc_ref):
    j = pl.program_id(1)
    nj = pl.num_programs(1)

    hid = h_ref.shape[1]
    two_tn = w13k_ref.shape[1]
    tn = two_tn // 2

    @pl.when(j == 0)
    def _init():
        acc_ref[...] = jnp.zeros_like(acc_ref)
        h = h_ref[...]
        # Fused LHS [h | h @ A13] for the gate/up projection, built once per
        # token tile.  A13 is zero-padded to KP lanes, so the padding columns
        # of the scratch come out zero automatically.
        a13 = jnp.dot(h, a13w_ref[...], preferred_element_type=jnp.float32)
        lhs_ref[:, :hid] = h
        lhs_ref[:, hid:] = a13.astype(lhs_ref.dtype)

    # One fused MXU call per ffn tile:
    #   [h | a13] @ [[W1^T|W3^T]; [B1^T 0; 0 B3^T]]  ->  [x1_j | x3_j]
    x13 = jnp.dot(lhs_ref[...], w13k_ref[...],
                  preferred_element_type=jnp.float32)
    x1 = x13[:, :tn]
    x3 = x13[:, tn:]
    x2 = (x1 * jax.nn.sigmoid(x1)) * x3                     # SiLU * up, f32
    x2c = x2.astype(w2f_ref.dtype)

    # Fused down projection + LoRA-A(down): one MXU call, f32 accumulation
    # over the ffn (j) axis into [tm, hid+RP].
    acc_ref[...] += jnp.dot(x2c, w2f_ref[...],
                            preferred_element_type=jnp.float32)

    @pl.when(j == nj - 1)
    def _finalize():
        acc = acc_ref[...]
        main = acc[:, :hid]
        lora2 = acc[:, hid:]                                # [tm, RP], f32
        # Keep the tiny final LoRA-B matmul in f32 (once per token tile).
        out = main + jnp.dot(lora2, w2bp_ref[...].astype(jnp.float32),
                             preferred_element_type=jnp.float32)
        out_ref[...] = out.astype(out_ref.dtype)


# -----------------------------------------------------------------------------
# Weight preparation (one-time / load-time)
# -----------------------------------------------------------------------------
def _vmem_cap_bytes():
    """3/4 of the chip's VMEM, or a v7x-safe fallback if unqueryable."""
    try:
        return int(pltpu.get_tpu_info().vmem_capacity_bytes) * 3 // 4
    except Exception:
        return 48 << 20


def _pick_tn(ffn, tn=None):
    """ffn tile width: multiple of 128 dividing ffn (fallback: ffn)."""
    if tn is None:
        cap = _vmem_cap_bytes()
        tn = 512 if cap >= (64 << 20) else 256   # smaller tiles on v7x-class VMEM
    tn = min(int(tn), ffn)
    while tn >= 128:
        if ffn % tn == 0 and tn % 128 == 0:
            return tn
        tn -= 128
    return ffn


def prepare_expert_weights(params, *, tn=None, dtype=jnp.bfloat16):
    """Transpose to [in, out], cast to the MXU dtype, and fuse:
       * w1/w3 column-interleaved per ffn tile, with the block-diagonal LoRA-B
         stacked underneath along K (zero-padded to KP rows)   -> w13k
       * fused LoRA-A for w1/w3, zero-padded to KP columns     -> a13
       * w2 with LoRA-A(down) concatenated along N (pad to RP) -> w2f
       * w2_b zero-padded to RP rows                           -> w2bp
    """
    ffn, hid = params["w1"].shape
    r = params["w1_a"].shape[0]
    tn = _pick_tn(ffn, tn)
    assert ffn % tn == 0, "ffn must be divisible by the ffn tile size"
    nf = ffn // tn

    kp = max(128, _round_up(2 * r, 128))   # padded K for the stacked LoRA-B
    rp = max(128, _round_up(r, 128))       # padded N for the fused LoRA-A(down)

    w1t = params["w1"].T.astype(dtype)        # [hid, ffn]
    w3t = params["w3"].T.astype(dtype)        # [hid, ffn]
    w2t = params["w2"].T.astype(dtype)        # [ffn, hid]
    w1at = params["w1_a"].T.astype(dtype)     # [hid, R]
    w3at = params["w3_a"].T.astype(dtype)     # [hid, R]
    w1bt = params["w1_b"].T.astype(dtype)     # [R, ffn]
    w3bt = params["w3_b"].T.astype(dtype)     # [R, ffn]
    w2at = params["w2_a"].T.astype(dtype)     # [ffn, R]
    w2bt = params["w2_b"].T.astype(dtype)     # [R, hid]

    # Tile-interleaved gate/up weights: columns [w1_j | w3_j] per ffn tile j.
    w13 = jnp.concatenate(
        [w1t.reshape(hid, nf, tn), w3t.reshape(hid, nf, tn)], axis=2
    ).reshape(hid, 2 * ffn)

    # Block-diagonal, tile-interleaved LoRA-B for w1/w3: [2R, 2*ffn],
    # zero-padded to [KP, 2*ffn] and stacked under w13 along K.
    z = jnp.zeros((r, nf, tn), dtype)
    b1 = jnp.concatenate([w1bt.reshape(r, nf, tn), z], axis=2)
    b3 = jnp.concatenate([z, w3bt.reshape(r, nf, tn)], axis=2)
    b13 = jnp.concatenate([b1, b3], axis=0).reshape(2 * r, 2 * ffn)
    b13 = jnp.pad(b13, ((0, kp - 2 * r), (0, 0)))
    w13k = jnp.concatenate([w13, b13], axis=0)              # [hid+KP, 2*ffn]

    # Fused LoRA-A (gate/up), zero-padded to KP columns: [hid, KP].
    a13 = jnp.pad(jnp.concatenate([w1at, w3at], axis=1),
                  ((0, 0), (0, kp - 2 * r)))

    # Fused down projection + LoRA-A(down): [ffn, hid+RP].
    w2f = jnp.concatenate([w2t, jnp.pad(w2at, ((0, 0), (0, rp - r)))], axis=1)

    # w2_b^T zero-padded to RP rows: [RP, hid].
    w2bp = jnp.pad(w2bt, ((0, rp - r), (0, 0)))

    return dict(w13k=w13k, a13=a13, w2f=w2f, w2bp=w2bp,
                hid=hid, ffn=ffn, r=r, tn=tn, kp=kp, rp=rp)


# -----------------------------------------------------------------------------
# Wrapper
# -----------------------------------------------------------------------------
def _footprint_bytes(tm, tn, hid, kp, rp, wd, od):
    """Exact per-kernel VMEM footprint: double-buffered inputs/output + scratches
    + an allowance for the internal [tm, 2*tn] f32 x13 intermediate."""
    inputs = (tm * hid * wd                 # h token tile
              + (hid + kp) * 2 * tn * wd    # w13k ffn tile
              + hid * kp * wd               # a13 (fused LoRA-A)
              + tn * (hid + rp) * wd        # w2f ffn tile
              + rp * hid * wd)              # w2bp
    out = tm * hid * od
    dbuf = 2 * (inputs + out)
    scratch = tm * (hid + kp) * wd + tm * (hid + rp) * 4
    internal = tm * 2 * tn * 4 + (2 << 20)
    return dbuf + scratch + internal


def mixtral_block_sparse_top2_mlp_lora(hidden_states, prepared, *,
                                       tm=None, out_dtype=None):
    """hidden_states: [T, hidden_dim]; `prepared`: output of prepare_expert_weights."""
    hid, ffn, tn = prepared["hid"], prepared["ffn"], prepared["tn"]
    kp, rp = prepared["kp"], prepared["rp"]
    nf = ffn // tn
    dtype = prepared["w13k"].dtype
    wd = jnp.dtype(dtype).itemsize
    out_dtype = hidden_states.dtype if out_dtype is None else out_dtype
    od = jnp.dtype(out_dtype).itemsize

    T = hidden_states.shape[0]
    cap = _vmem_cap_bytes()

    # Token tile selection: chip-dependent default (512 on 128-MiB-VMEM chips,
    # 256 on 64-MiB v7x), aligned to the bf16 sublane pack, shrunk until the
    # exact double-buffered footprint fits under the scoped-VMEM cap.
    if tm is None:
        tm = 256 if cap <= (48 << 20) else 512
    align = 16 if wd == 2 else 8
    tm = min(int(tm), pl.cdiv(T, align) * align)
    tm = max(align, tm - tm % align)
    while tm > 128 and _footprint_bytes(tm, tn, hid, kp, rp, wd, od) > cap:
        tm -= 128

    tp = pl.cdiv(T, tm) * tm
    h = hidden_states.astype(dtype)
    if tp != T:
        # Ragged MoE token counts: zero rows give zero outputs, sliced off below.
        h = jnp.pad(h, ((0, tp - T), (0, 0)))

    grid = (tp // tm, nf)

    in_specs = [
        pl.BlockSpec((tm, hid), lambda i, j: (i, 0)),          # h token tile
        pl.BlockSpec((hid + kp, 2 * tn), lambda i, j: (0, j)),  # [W13^T; B13] tile
        pl.BlockSpec((hid, kp), lambda i, j: (0, 0)),          # fused LoRA-A (gate/up)
        pl.BlockSpec((tn, hid + rp), lambda i, j: (j, 0)),     # [W2^T | W2a^T] tile
        pl.BlockSpec((rp, hid), lambda i, j: (0, 0)),          # W2b^T (padded)
    ]
    out_spec = pl.BlockSpec((tm, hid), lambda i, j: (i, 0))

    scratch_shapes = [
        pltpu.VMEM((tm, hid + kp), dtype),       # fused LHS [h | a13]
        pltpu.VMEM((tm, hid + rp), jnp.float32),  # fused f32 accumulator
    ]

    fp = _footprint_bytes(tm, tn, hid, kp, rp, wd, od)
    vmem_limit = int(min(cap, max(32 << 20, int(fp * 1.2))))

    out = pl.pallas_call(
        _mlp_lora_kernel,
        out_shape=jax.ShapeDtypeStruct((tp, hid), out_dtype),
        grid_spec=pltpu.PrefetchScalarGridSpec(
            num_scalar_prefetch=0,
            grid=grid,
            in_specs=in_specs,
            out_specs=out_spec,
            scratch_shapes=scratch_shapes,
        ),
        compiler_params=pltpu.CompilerParams(
            dimension_semantics=("parallel", "arbitrary"),
            vmem_limit_bytes=vmem_limit),
    )(h, prepared["w13k"], prepared["a13"], prepared["w2f"], prepared["w2bp"])

    return out[:T] if tp != T else out


# -----------------------------------------------------------------------------
# Reference & test
# -----------------------------------------------------------------------------
def _reference(hidden_states, p):
    """Pure-JAX (f32) reference mirroring the PyTorch forward exactly."""
    h = hidden_states
    x1 = h @ p["w1"].T + (h @ p["w1_a"].T) @ p["w1_b"].T
    x3 = h @ p["w3"].T + (h @ p["w3_a"].T) @ p["w3_b"].T
    x2 = jax.nn.silu(x1) * x3
    return x2 @ p["w2"].T + (x2 @ p["w2_a"].T) @ p["w2_b"].T


if __name__ == "__main__":
    # Small, MXU/vreg-friendly shapes consistent with the module.
    hidden_dim = 128          # config.hidden_size
    ffn_dim = 256             # config.intermediate_size
    tokens = 24               # ragged token count (not a tile multiple) on purpose

    key = jax.random.PRNGKey(0)
    keys = jax.random.split(key, 10)

    def init(k, shape, scale=0.02):
        return scale * jax.random.normal(k, shape, dtype=jnp.float32)

    # Deterministic synthetic weights (PyTorch nn.Linear convention: [out, in]).
    # TODO(synk): the SVD-based LoRA initialization from delta weights is a
    # setup-time detail, not part of the forward hot path; weights are random.
    params = {
        "w1":   init(keys[0], (ffn_dim, hidden_dim)),
        "w2":   init(keys[1], (hidden_dim, ffn_dim)),
        "w3":   init(keys[2], (ffn_dim, hidden_dim)),
        "w1_a": init(keys[3], (LORA_R, hidden_dim)),
        "w1_b": init(keys[4], (ffn_dim, LORA_R)),
        "w2_a": init(keys[5], (LORA_R, ffn_dim)),
        "w2_b": init(keys[6], (hidden_dim, LORA_R)),
        "w3_a": init(keys[7], (LORA_R, hidden_dim)),
        "w3_b": init(keys[8], (ffn_dim, LORA_R)),
    }

    hidden_states = jax.random.normal(keys[9], (tokens, hidden_dim),
                                      dtype=jnp.float32)

    # One-time weight preparation (transpose/cast/fuse/pad), hoisted out of the
    # per-call path.  tn=128 at toy dims so the ffn grid axis has 2 steps.
    prepared = prepare_expert_weights(params, tn=128, dtype=jnp.bfloat16)

    ref = _reference(hidden_states, params)

    # tm=16 exercises the multi-token-tile + ragged-padding paths at toy shapes.
    out = mixtral_block_sparse_top2_mlp_lora(hidden_states, prepared, tm=16)
    out = jax.block_until_ready(out)
    assert out.shape == (tokens, hidden_dim)
    assert jnp.allclose(out, ref, atol=2e-3, rtol=2e-2), "mismatch vs reference (tm=16)"

    # Default (chip-adaptive) token tile path.
    out2 = mixtral_block_sparse_top2_mlp_lora(hidden_states, prepared)
    out2 = jax.block_until_ready(out2)
    assert out2.shape == (tokens, hidden_dim)
    assert jnp.allclose(out2, ref, atol=2e-3, rtol=2e-2), "mismatch vs reference (auto tm)"

    print("KERNEL_OK")
</pallas_src>

<mosaic_0001>
module attributes {stable_mosaic.version = 11 : i64} {
  func.func @_mlp_lora_kernel(%arg0: i32, %arg1: i32, %arg2: memref<16x128xbf16, #tpu.memory_space<vmem>>, %arg3: memref<256x256xbf16, #tpu.memory_space<vmem>>, %arg4: memref<128x128xbf16, #tpu.memory_space<vmem>>, %arg5: memref<128x256xbf16, #tpu.memory_space<vmem>>, %arg6: memref<128x128xbf16, #tpu.memory_space<vmem>>, %arg7: memref<16x128xf32, #tpu.memory_space<vmem>>, %arg8: memref<16x256xbf16, #tpu.memory_space<vmem>>, %arg9: memref<16x256xf32, #tpu.memory_space<vmem>>) attributes {dimension_semantics = [#tpu.dimension_semantics<parallel>, #tpu.dimension_semantics<arbitrary>], iteration_bounds = array<i64: 2, 2>, scalar_prefetch = 0 : i64, scratch_operands = 2 : i64, tpu.core_type = #tpu.core_type<tc>, window_params = [{transform_indices = @transform_0, window_bounds = array<i64: 16, 128>}, {transform_indices = @transform_1, window_bounds = array<i64: 256, 256>}, {pipeline_mode = #tpu.pipeline_mode<synchronous>, transform_indices = @transform_2, window_bounds = array<i64: 128, 128>}, {transform_indices = @transform_3, window_bounds = array<i64: 128, 256>}, {pipeline_mode = #tpu.pipeline_mode<synchronous>, transform_indices = @transform_4, window_bounds = array<i64: 128, 128>}, {transform_indices = @transform_5, window_bounds = array<i64: 16, 128>}]} {
    %c0_i32 = arith.constant 0 : i32
    %0 = arith.cmpi eq, %arg1, %c0_i32 : i32
    %1 = arith.extui %0 : i1 to i32
    %c0_i32_0 = arith.constant 0 : i32
    %2 = arith.cmpi ne, %1, %c0_i32_0 : i32
    scf.if %2 {
      %cst_13 = arith.constant 0.000000e+00 : f32
      %24 = vector.broadcast %cst_13 : f32 to vector<16x256xf32>
      %c0_14 = arith.constant 0 : index
      %c0_15 = arith.constant 0 : index
      %25 = vector.load %arg9[%c0_14, %c0_15] : memref<16x256xf32, #tpu.memory_space<vmem>>, vector<16x256xf32>
      tpu.vector_store %arg9[%c0_14, %c0_15], %24 {strides = array<i32>} : memref<16x256xf32, #tpu.memory_space<vmem>>, vector<16x256xf32>,
      %c0_16 = arith.constant 0 : index
      %c0_17 = arith.constant 0 : index
      %26 = vector.load %arg2[%c0_16, %c0_17] : memref<16x128xbf16, #tpu.memory_space<vmem>>, vector<16x128xbf16>
      %c0_18 = arith.constant 0 : index
      %c0_19 = arith.constant 0 : index
      %27 = vector.load %arg4[%c0_18, %c0_19] : memref<128x128xbf16, #tpu.memory_space<vmem>>, vector<128x128xbf16>
      %cst_20 = arith.constant dense<0.000000e+00> : vector<16x128xf32>
      %28 = tpu.matmul %26, %27, %cst_20 {dimension_numbers = #tpu.dot_dimension_numbers<[1], [0], [0], [1], [0, 0, 1, 1], [], []>} : vector<16x128xbf16>, vector<128x128xbf16>, vector<16x128xf32> -> vector<16x128xf32>
      %c0_21 = arith.constant 0 : index
      %c0_22 = arith.constant 0 : index
      %29 = vector.load %arg8[%c0_21, %c0_22] : memref<16x256xbf16, #tpu.memory_space<vmem>>, vector<16x128xbf16>
      tpu.vector_store %arg8[%c0_21, %c0_22], %26 {strides = array<i32>} : memref<16x256xbf16, #tpu.memory_space<vmem>>, vector<16x128xbf16>,
      %30 = arith.truncf %28 : vector<16x128xf32> to vector<16x128xbf16>
      %c0_23 = arith.constant 0 : index
      %c128 = arith.constant 128 : index
      %31 = vector.load %arg8[%c0_23, %c128] : memref<16x256xbf16, #tpu.memory_space<vmem>>, vector<16x128xbf16>
      tpu.vector_store %arg8[%c0_23, %c128], %30 {strides = array<i32>} : memref<16x256xbf16, #tpu.memory_space<vmem>>, vector<16x128xbf16>,
    } else {
    }
    %c0 = arith.constant 0 : index
    %c0_1 = arith.constant 0 : index
    %3 = vector.load %arg8[%c0, %c0_1] : memref<16x256xbf16, #tpu.memory_space<vmem>>, vector<16x256xbf16>
    %c0_2 = arith.constant 0 : index
    %c0_3 = arith.constant 0 : index
    %4 = vector.load %arg3[%c0_2, %c0_3] : memref<256x256xbf16, #tpu.memory_space<vmem>>, vector<256x256xbf16>
    %cst = arith.constant dense<0.000000e+00> : vector<16x256xf32>
    %5 = tpu.matmul %3, %4, %cst {dimension_numbers = #tpu.dot_dimension_numbers<[1], [0], [0], [1], [0, 0, 1, 1], [], []>} : vector<16x256xbf16>, vector<256x256xbf16>, vector<16x256xf32> -> vector<16x256xf32>
    %6 = vector.extract_strided_slice %5 {offsets = [0, 0], sizes = [16, 128], strides = [1, 1]} : vector<16x256xf32> to vector<16x128xf32>
    %7 = vector.extract_strided_slice %5 {offsets = [0, 128], sizes = [16, 128], strides = [1, 1]} : vector<16x256xf32> to vector<16x128xf32>
    %8 = arith.negf %6 : vector<16x128xf32>
    %9 = math.exp %8 : vector<16x128xf32>
    %cst_4 = arith.constant 1.000000e+00 : f32
    %10 = vector.broadcast %cst_4 : f32 to vector<16x128xf32>
    %11 = arith.addf %10, %9 : vector<16x128xf32>
    %12 = arith.divf %10, %11 : vector<16x128xf32>
    %13 = arith.mulf %6, %12 : vector<16x128xf32>
    %14 = arith.mulf %13, %7 : vector<16x128xf32>
    %15 = arith.truncf %14 : vector<16x128xf32> to vector<16x128xbf16>
    %c0_5 = arith.constant 0 : index
    %c0_6 = arith.constant 0 : index
    %16 = vector.load %arg9[%c0_5, %c0_6] : memref<16x256xf32, #tpu.memory_space<vmem>>, vector<16x256xf32>
    %c0_7 = arith.constant 0 : index
    %c0_8 = arith.constant 0 : index
    %17 = vector.load %arg5[%c0_7, %c0_8] : memref<128x256xbf16, #tpu.memory_space<vmem>>, vector<128x256xbf16>
    %cst_9 = arith.constant dense<0.000000e+00> : vector<16x256xf32>
    %18 = tpu.matmul %15, %17, %cst_9 {dimension_numbers = #tpu.dot_dimension_numbers<[1], [0], [0], [1], [0, 0, 1, 1], [], []>} : vector<16x128xbf16>, vector<128x256xbf16>, vector<16x256xf32> -> vector<16x256xf32>
    %19 = arith.addf %16, %18 : vector<16x256xf32>
    %c0_10 = arith.constant 0 : index
    %c0_11 = arith.constant 0 : index
    %20 = vector.load %arg9[%c0_10, %c0_11] : memref<16x256xf32, #tpu.memory_space<vmem>>, vector<16x256xf32>
    tpu.vector_store %arg9[%c0_10, %c0_11], %19 {strides = array<i32>} : memref<16x256xf32, #tpu.memory_space<vmem>>, vector<16x256xf32>,
    %c1_i32 = arith.constant 1 : i32
    %21 = arith.cmpi eq, %arg1, %c1_i32 : i32
    %22 = arith.extui %21 : i1 to i32
    %c0_i32_12 = arith.constant 0 : i32
    %23 = arith.cmpi ne, %22, %c0_i32_12 : i32
    scf.if %23 {
      %c0_13 = arith.constant 0 : index
      %c0_14 = arith.constant 0 : index
      %24 = vector.load %arg9[%c0_13, %c0_14] : memref<16x256xf32, #tpu.memory_space<vmem>>, vector<16x256xf32>
      %25 = vector.extract_strided_slice %24 {offsets = [0, 0], sizes = [16, 128], strides = [1, 1]} : vector<16x256xf32> to vector<16x128xf32>
      %26 = vector.extract_strided_slice %24 {offsets = [0, 128], sizes = [16, 128], strides = [1, 1]} : vector<16x256xf32> to vector<16x128xf32>
      %c0_15 = arith.constant 0 : index
      %c0_16 = arith.constant 0 : index
      %27 = vector.load %arg6[%c0_15, %c0_16] : memref<128x128xbf16, #tpu.memory_space<vmem>>, vector<128x128xbf16>
      %28 = arith.extf %27 : vector<128x128xbf16> to vector<128x128xf32>
      %cst_17 = arith.constant dense<0.000000e+00> : vector<16x128xf32>
      %29 = tpu.matmul %26, %28, %cst_17 {dimension_numbers = #tpu.dot_dimension_numbers<[1], [0], [0], [1], [0, 0, 1, 1], [], []>} : vector<16x128xf32>, vector<128x128xf32>, vector<16x128xf32> -> vector<16x128xf32>
      %30 = arith.addf %25, %29 : vector<16x128xf32>
      %c0_18 = arith.constant 0 : index
      %c0_19 = arith.constant 0 : index
      %31 = vector.load %arg7[%c0_18, %c0_19] : memref<16x128xf32, #tpu.memory_space<vmem>>, vector<16x128xf32>
      tpu.vector_store %arg7[%c0_18, %c0_19], %30 {strides = array<i32>} : memref<16x128xf32, #tpu.memory_space<vmem>>, vector<16x128xf32>,
    } else {
    }
    return
  }
  func.func @transform_0(%arg0: i32, %arg1: i32) -> (i32, i32) {
    %c0_i32 = arith.constant 0 : i32
    %c0_i32_0 = arith.constant 0 : i32
    return %arg0, %c0_i32 : i32, i32
  }
  func.func @transform_1(%arg0: i32, %arg1: i32) -> (i32, i32) {
    %c0_i32 = arith.constant 0 : i32
    %c0_i32_0 = arith.constant 0 : i32
    return %c0_i32, %arg1 : i32, i32
  }
  func.func @transform_2(%arg0: i32, %arg1: i32) -> (i32, i32) {
    %c0_i32 = arith.constant 0 : i32
    %c0_i32_0 = arith.constant 0 : i32
    %c0_i32_1 = arith.constant 0 : i32
    return %c0_i32, %c0_i32_0 : i32, i32
  }
  func.func @transform_3(%arg0: i32, %arg1: i32) -> (i32, i32) {
    %c0_i32 = arith.constant 0 : i32
    %c0_i32_0 = arith.constant 0 : i32
    return %arg1, %c0_i32 : i32, i32
  }
  func.func @transform_4(%arg0: i32, %arg1: i32) -> (i32, i32) {
    %c0_i32 = arith.constant 0 : i32
    %c0_i32_0 = arith.constant 0 : i32
    %c0_i32_1 = arith.constant 0 : i32
    return %c0_i32, %c0_i32_0 : i32, i32
  }
  func.func @transform_5(%arg0: i32, %arg1: i32) -> (i32, i32) {
    %c0_i32 = arith.constant 0 : i32
    %c0_i32_0 = arith.constant 0 : i32
    return %arg0, %c0_i32 : i32, i32
  }
}

</mosaic_0001>

<llo_original>
// kernel: tpu_custom_call.1
$region0: #{tpu_custom_call.1}
  #allocation0 [shape = 'u32[]', space=smem, size = 0x4, offset = 0x4, fixed_abs, tag = 'smem constant byte address 0x4 - core index']
  #allocation1 [shape = 'u32[144,128]{1,0:T(1,128)}', space=vmem, size = 0x12000, scoped, tag = 'internal scratch']
  #allocation2 [shape = 'bf16[16,256]{1,0:T(16,128)(2,1)}', space=vmem, size = 0x2000, scoped, tag = 'scratch operand']
  #allocation3 [shape = 'f32[16,256]{1,0:T(8,128)}', space=vmem, size = 0x4000, scoped, tag = 'scratch operand']
  %s0 = inlined_call_operand.hbm [shape: bf16[32,128], index: 0, kind: input, shape index: {}]
  %s1 = inlined_call_operand.hbm [shape: bf16[256,512], index: 1, kind: input, shape index: {}]
  %s2 = inlined_call_operand.hbm [shape: bf16[128,128], index: 2, kind: input, shape index: {}]
  %s3 = inlined_call_operand.hbm [shape: bf16[256,256], index: 3, kind: input, shape index: {}]
  %s4 = inlined_call_operand.hbm [shape: bf16[128,128], index: 4, kind: input, shape index: {}]
  %s5 = inlined_call_operand.hbm [shape: f32[32,128], index: 5, kind: output, shape index: {}]
  %s6 = sld [smem:[#allocation0]]
  $region81: #{tpu_custom_call.1} parent=0
    _
  %s8 = ssub.s32 1, %s6
  %s9 = scalar_select 0, %s8, %s6
  $region1: #{tpu_custom_call.1} parent=0
    #allocation4 [shape = 'u8[8192]{0}', space=vmem, size = 0x2000, scoped, tag = 'input window, operand 0']
    #allocation5 [shape = 's32[2]{0}', space=sflag, size = 0x8, scoped, tag = 'scoped memory for tpu_custom_call.1']
    #allocation6 [shape = 's32[2]{0}', space=sflag, size = 0x8, scoped, tag = 'scoped memory for tpu_custom_call.1']
    #allocation7 [shape = 'u8[262144]{0}', space=vmem, size = 0x40000, scoped, tag = 'input window, operand 1']
    #allocation8 [shape = 's32[2]{0}', space=sflag, size = 0x8, scoped, tag = 'scoped memory for tpu_custom_call.1']
    #allocation9 [shape = 'u8[32768]{0}', space=vmem, size = 0x8000, scoped, tag = 'input window, operand 2, single buffered']
    #allocation10 [shape = 'u8[131072]{0}', space=vmem, size = 0x20000, scoped, tag = 'input window, operand 3']
    #allocation11 [shape = 's32[2]{0}', space=sflag, size = 0x8, scoped, tag = 'scoped memory for tpu_custom_call.1']
    #allocation12 [shape = 'u8[32768]{0}', space=vmem, size = 0x8000, scoped, tag = 'input window, operand 4, single buffered']
    #allocation13 [shape = 'u8[16384]{0}', space=vmem, size = 0x4000, scoped, tag = 'output window, operand 0']
    %10 = vsyncpa [#allocation5], 0
    %s11 = scalar_lea.sflag [#allocation5], 1
    %12 = vsyncpa %s11, 0
    %13 = vsyncpa [#allocation8], 0
    %s14 = scalar_lea.sflag [#allocation8], 1
    %15 = vsyncpa %s14, 0
    %16 = vsyncpa [#allocation11], 0
    %s17 = scalar_lea.sflag [#allocation11], 1
    %18 = vsyncpa %s17, 0
    %19 = vsyncpa [#allocation6], 0
    %s20 = scalar_lea.sflag [#allocation6], 1
    %21 = vsyncpa %s20, 0
    loop: start=0, step=1, limit=6
    $region2: #{tpu_custom_call.1} parent=1 // loop_pre_header
      _
    $region3: #{tpu_custom_call.1} parent=1 // loop_header
      %s23 = sphi 0, %s27
      %p24 = scmp.ge.s32.totalorder %s23, 6
      %s30 = sphi 0, %s42
      %s31 = sphi 0, %s38
      %s32 = sphi 0, %s30
      %s33 = sphi 0, %s31
      %s34 = sphi 0, %s32
      %s35 = sphi 0, %s33
      %s45 = sphi 0, %s47
      %s48 = sphi 0, %s45
      %s49 = sphi 0, %s48
      %s65 = sphi 0, %s49
      %s71 = sphi 0, %s73
      %s74 = sphi 0, %s71
      %s75 = sphi 0, %s74
      %s91 = sphi 0, %s75
      %s95 = sphi 0, %s95
      %s97 = sphi 0, %s95
      %s98 = sphi 0, %s97
      %s112 = sphi 0, %s98
      %s118 = sphi 0, %s120
      %s121 = sphi 0, %s118
      %s122 = sphi 0, %s121
      %s138 = sphi 0, %s122
      %s142 = sphi 0, %s142
      %s144 = sphi 0, %s142
      %s145 = sphi 0, %s144
      %s159 = sphi 0, %s145
      %s165 = sphi 0, %s167
      %s168 = sphi 0, %s165
      %s169 = sphi 0, %s168
      %s185 = sphi 0, %s169
    $region4: #{tpu_custom_call.1} parent=1 // loop_header_branch
      %26 = sbr.rel (%p24) target = $region8
    $region5: #{tpu_custom_call.1} parent=1 // loop_body
      %s28 = ssub.s32 %s23, 1
      %s29 = ssub.s32 %s23, 2
      %s36 = sadd.s32 1, %s31
      %p37 = scmp.ge.s32.totalorder %s36, 2
      %s38 = scalar_select %p37, 0, %s36
      %s39 = sadd.s32 1, %s30
      %s40 = scalar_select %p37, %s39, %s30
      %p41 = scmp.ge.s32.totalorder %s40, 2
      %s42 = scalar_select %p41, 0, %s40
      %s43 = ssub.s32 %s30, %s42
      %p44 = scmp.eq.s32.totalorder %s43, 0
      %s46 = sadd.s32 %s45, 1
      %s47 = scalar_select %p44, %s45, %s46
      %p50 = pneg %p44
      %p51 = scmp.eq.s32.totalorder %s23, 3
      %p52 = por %p50, %p51
      %p53 = scmp.ne.s32.totalorder %s45, %s48
      %p54 = scmp.eq.s32.totalorder %s23, 0
      %p55 = por %p53, %p54
      %p56 = scmp.ne.s32.totalorder %s45, %s48
      %p57 = scmp.eq.s32.totalorder %s28, 3
      %p58 = por %p56, %p57
      %p59 = scmp.ne.s32.totalorder %s48, %s49
      %p60 = scmp.eq.s32.totalorder %s28, 0
      %p61 = por %p59, %p60
      %p62 = scmp.ne.s32.totalorder %s48, %s49
      %p63 = scmp.eq.s32.totalorder %s29, 3
      %p64 = por %p62, %p63
      %p66 = scmp.ne.s32.totalorder %s49, %s65
      %p67 = scmp.eq.s32.totalorder %s29, 0
      %p68 = por %p66, %p67
      %s69 = ssub.s32 %s31, %s38
      %p70 = scmp.eq.s32.totalorder %s69, 0
      %s72 = sadd.s32 %s71, 1
      %s73 = scalar_select %p70, %s71, %s72
      %p76 = pneg %p70
      %p77 = scmp.eq.s32.totalorder %s23, 3
      %p78 = por %p76, %p77
      %p79 = scmp.ne.s32.totalorder %s71, %s74
      %p80 = scmp.eq.s32.totalorder %s23, 0
      %p81 = por %p79, %p80
      %p82 = scmp.ne.s32.totalorder %s71, %s74
      %p83 = scmp.eq.s32.totalorder %s28, 3
      %p84 = por %p82, %p83
      %p85 = scmp.ne.s32.totalorder %s74, %s75
      %p86 = scmp.eq.s32.totalorder %s28, 0
      %p87 = por %p85, %p86
      %p88 = scmp.ne.s32.totalorder %s74, %s75
      %p89 = scmp.eq.s32.totalorder %s29, 3
      %p90 = por %p88, %p89
      %p92 = scmp.ne.s32.totalorder %s75, %s91
      %p93 = scmp.eq.s32.totalorder %s29, 0
      %p94 = por %p92, %p93
      %s96 = sadd.s32 %s95, 1
      %p99 = scmp.eq.s32.totalorder %s23, 3
      %p100 = scmp.ne.s32.totalorder %s95, %s97
      %p101 = scmp.eq.s32.totalorder %s23, 0
      %p102 = por %p100, %p101
      %p103 = scmp.ne.s32.totalorder %s95, %s97
      %p104 = scmp.eq.s32.totalorder %s28, 3
      %p105 = por %p103, %p104
      %p106 = scmp.ne.s32.totalorder %s97, %s98
      %p107 = scmp.eq.s32.totalorder %s28, 0
      %p108 = por %p106, %p107
      %p109 = scmp.ne.s32.totalorder %s97, %s98
      %p110 = scmp.eq.s32.totalorder %s29, 3
      %p111 = por %p109, %p110
      %p113 = scmp.ne.s32.totalorder %s98, %s112
      %p114 = scmp.eq.s32.totalorder %s29, 0
      %p115 = por %p113, %p114
      %s116 = ssub.s32 %s31, %s38
      %p117 = scmp.eq.s32.totalorder %s116, 0
      %s119 = sadd.s32 %s118, 1
      %s120 = scalar_select %p117, %s118, %s119
      %p123 = pneg %p117
      %p124 = scmp.eq.s32.totalorder %s23, 3
      %p125 = por %p123, %p124
      %p126 = scmp.ne.s32.totalorder %s118, %s121
      %p127 = scmp.eq.s32.totalorder %s23, 0
      %p128 = por %p126, %p127
      %p129 = scmp.ne.s32.totalorder %s118, %s121
      %p130 = scmp.eq.s32.totalorder %s28, 3
      %p131 = por %p129, %p130
      %p132 = scmp.ne.s32.totalorder %s121, %s122
      %p133 = scmp.eq.s32.totalorder %s28, 0
      %p134 = por %p132, %p133
      %p135 = scmp.ne.s32.totalorder %s121, %s122
      %p136 = scmp.eq.s32.totalorder %s29, 3
      %p137 = por %p135, %p136
      %p139 = scmp.ne.s32.totalorder %s122, %s138
      %p140 = scmp.eq.s32.totalorder %s29, 0
      %p141 = por %p139, %p140
      %s143 = sadd.s32 %s142, 1
      %p146 = scmp.eq.s32.totalorder %s23, 3
      %p147 = scmp.ne.s32.totalorder %s142, %s144
      %p148 = scmp.eq.s32.totalorder %s23, 0
      %p149 = por %p147, %p148
      %p150 = scmp.ne.s32.totalorder %s142, %s144
      %p151 = scmp.eq.s32.totalorder %s28, 3
      %p152 = por %p150, %p151
      %p153 = scmp.ne.s32.totalorder %s144, %s145
      %p154 = scmp.eq.s32.totalorder %s28, 0
      %p155 = por %p153, %p154
      %p156 = scmp.ne.s32.totalorder %s144, %s145
      %p157 = scmp.eq.s32.totalorder %s29, 3
      %p158 = por %p156, %p157
      %p160 = scmp.ne.s32.totalorder %s145, %s159
      %p161 = scmp.eq.s32.totalorder %s29, 0
      %p162 = por %p160, %p161
      %s163 = ssub.s32 %s30, %s42
      %p164 = scmp.eq.s32.totalorder %s163, 0
      %s166 = sadd.s32 %s165, 1
      %s167 = scalar_select %p164, %s165, %s166
      %p170 = pneg %p164
      %p171 = scmp.eq.s32.totalorder %s23, 3
      %p172 = por %p170, %p171
      %p173 = scmp.ne.s32.totalorder %s165, %s168
      %p174 = scmp.eq.s32.totalorder %s23, 0
      %p175 = por %p173, %p174
      %p176 = scmp.ne.s32.totalorder %s165, %s168
      %p177 = scmp.eq.s32.totalorder %s28, 3
      %p178 = por %p176, %p177
      %p179 = scmp.ne.s32.totalorder %s168, %s169
      %p180 = scmp.eq.s32.totalorder %s28, 0
      %p181 = por %p179, %p180
      %p182 = scmp.ne.s32.totalorder %s168, %s169
      %p183 = scmp.eq.s32.totalorder %s29, 3
      %p184 = por %p182, %p183
      %p186 = scmp.ne.s32.totalorder %s169, %s185
      %p187 = scmp.eq.s32.totalorder %s29, 0
      %p188 = por %p186, %p187
      %p189 = scmp.le.s32.totalorder 1, %s23
      %p190 = scmp.lt.s32.totalorder %s23, 5
      %p191 = pnand %p189, %p190
      %p192 = pneg %p191
      // Predicated region
      $region9: #{tpu_custom_call.1} parent=5 // pred_check
        _
      $region10: #{tpu_custom_call.1} parent=5 // pred_check_branch
        %194 = sbr.rel (%p191) target = $region12
      $region11: #{tpu_custom_call.1} parent=5 // pred_region
        %s195 = ssub.s32 %s23, 1
        // Predicated region
        $region13: #{tpu_custom_call.1} parent=11 // pred_check
          %p196 = pneg %p108
        $region14: #{tpu_custom_call.1} parent=11 // pred_check_branch
          %198 = sbr.rel (%p196) target = $region16
        $region15: #{tpu_custom_call.1} parent=11 // pred_region
          %s200 = ssub.s32 1024, 1024
          %201 = vsyncadd [#allocation8], %s200
          %s202 = sshll.u32 [#allocation9], 4
          %s203 = int_to_ptr.vmem [resolvable:$true] %s202
          %208 = dma.hbm_to_vmem [thread:$0]  %s2, 1024, %s203, [#allocation8], 64, 64, 4
        $region16: #{tpu_custom_call.1} parent=11 // pred_fallthru
          _
        // Predicated region
        $region17: #{tpu_custom_call.1} parent=11 // pred_check
          %p209 = pneg %p155
        $region18: #{tpu_custom_call.1} parent=11 // pred_check_branch
          %211 = sbr.rel (%p209) target = $region20
        $region19: #{tpu_custom_call.1} parent=11 // pred_region
          %s213 = ssub.s32 1024, 1024
          %214 = vsyncadd [#allocation11], %s213
          %s215 = sshll.u32 [#allocation12], 4
          %s216 = int_to_ptr.vmem [resolvable:$true] %s215
          %221 = dma.hbm_to_vmem [thread:$0]  %s4, 1024, %s216, [#allocation11], 64, 64, 4
        $region20: #{tpu_custom_call.1} parent=11 // pred_fallthru
          _
      $region12: #{tpu_custom_call.1} parent=5 // pred_fallthru
        _
      %p222 = scmp.lt.s32.totalorder %s23, 4
      // Predicated region
      $region21: #{tpu_custom_call.1} parent=5 // pred_check
        %p223 = pneg %p222
      $region22: #{tpu_custom_call.1} parent=5 // pred_check_branch
        %225 = sbr.rel (%p223) target = $region24
      $region23: #{tpu_custom_call.1} parent=5 // pred_region
        // Predicated region
        $region25: #{tpu_custom_call.1} parent=23 // pred_check
          %p226 = pneg %p55
        $region26: #{tpu_custom_call.1} parent=23 // pred_check_branch
          %228 = sbr.rel (%p226) target = $region28
        $region27: #{tpu_custom_call.1} parent=23 // pred_region
          %s229 = sand.u32 %s45, 1
          %s230 = scalar_lea.sflag [#allocation5], %s229
          %s231 = sand.u32 %s45, 1
          %s232 = smul.addr %s231, 8
          %s233 = scalar_lea.vmem [#allocation4], %s232
          %s234 = smul.u32 2, %s30
          %s236 = ssub.s32 128, 128
          %237 = vsyncadd %s230, %s236
          %s238 = smul.addr %s234, 64
          %s239 = scalar_lea.hbm %s0, %s238
          %s240 = sshll.u32 %s233, 4
          %s241 = int_to_ptr.vmem [resolvable:$true] %s240
          %246 = dma.hbm_to_vmem [thread:$0]  %s239, 128, %s241, %s230, 64, 64, 4
        $region28: #{tpu_custom_call.1} parent=23 // pred_fallthru
          _
        // Predicated region
        $region29: #{tpu_custom_call.1} parent=23 // pred_check
          %p247 = pneg %p81
        $region30: #{tpu_custom_call.1} parent=23 // pred_check_branch
          %249 = sbr.rel (%p247) target = $region32
        $region31: #{tpu_custom_call.1} parent=23 // pred_region
          %s250 = sand.u32 %s23, 1
          %s251 = scalar_lea.sflag [#allocation8], %s250
          %s252 = sand.u32 %s71, 1
          %s253 = smul.addr %s252, 256
          %s254 = scalar_lea.vmem [#allocation7], %s253
          %s255 = smul.u32 2, %s31
          %s257 = ssub.s32 4096, 4096
          %258 = vsyncadd %s251, %s257
          %s259 = smul.addr %s255, 64
          %s260 = scalar_lea.hbm %s1, %s259
          %s261 = sshll.u32 %s254, 4
          %s262 = int_to_ptr.vmem [resolvable:$true] %s261
          %267 = dma.hbm_to_vmem [thread:$0]  %s260, 4096, %s262, %s251, 256, 128, 8
        $region32: #{tpu_custom_call.1} parent=23 // pred_fallthru
          _
        // Predicated region
        $region33: #{tpu_custom_call.1} parent=23 // pred_check
          %p268 = pneg %p128
        $region34: #{tpu_custom_call.1} parent=23 // pred_check_branch
          %270 = sbr.rel (%p268) target = $region36
        $region35: #{tpu_custom_call.1} parent=23 // pred_region
          %s271 = sand.u32 %s23, 1
          %s272 = scalar_lea.sflag [#allocation11], %s271
          %s273 = sand.u32 %s118, 1
          %s274 = smul.addr %s273, 128
          %s275 = scalar_lea.vmem [#allocation10], %s274
          %s276 = smul.u32 16, %s31
          %s278 = ssub.s32 2048, 2048
          %279 = vsyncadd %s272, %s278
          %s280 = smul.addr %s276, 2
          %s281 = smul.addr %s280, 64
          %s282 = scalar_lea.hbm %s3, %s281
          %s283 = sshll.u32 %s275, 4
          %s284 = int_to_ptr.vmem [resolvable:$true] %s283
          %289 = dma.hbm_to_vmem [thread:$0]  %s282, 2048, %s284, %s272, 128, 128, 8
        $region36: #{tpu_custom_call.1} parent=23 // pred_fallthru
          _
      $region24: #{tpu_custom_call.1} parent=5 // pred_fallthru
        _
      %p290 = scmp.le.s32.totalorder 1, %s23
      %p291 = scmp.lt.s32.totalorder %s23, 5
      %p292 = pnand %p290, %p291
      %p293 = pneg %p292
      // Predicated region
      $region37: #{tpu_custom_call.1} parent=5 // pred_check
        _
      $region38: #{tpu_custom_call.1} parent=5 // pred_check_branch
        %295 = sbr.rel (%p292) target = $region40
      $region39: #{tpu_custom_call.1} parent=5 // pred_region
        %s296 = ssub.s32 %s23, 1
        %s297 = sand.u32 %s48, 1
        %s298 = scalar_lea.sflag [#allocation5], %s297
        %s299 = sand.u32 %s48, 1
        %s300 = smul.addr %s299, 8
        %s301 = scalar_lea.vmem [#allocation4], %s300
        // Predicated region
        $region41: #{tpu_custom_call.1} parent=39 // pred_check
          %p302 = pneg %p61
        $region42: #{tpu_custom_call.1} parent=39 // pred_check_branch
          %304 = sbr.rel (%p302) target = $region44
        $region43: #{tpu_custom_call.1} parent=39 // pred_region
          %305 = dma.done %s298, 128
        $region44: #{tpu_custom_call.1} parent=39 // pred_fallthru
          _
        %s306 = sand.u32 %s28, 1
        %s307 = scalar_lea.sflag [#allocation8], %s306
        %s308 = sand.u32 %s74, 1
        %s309 = smul.addr %s308, 256
        %s310 = scalar_lea.vmem [#allocation7], %s309
        // Predicated region
        $region45: #{tpu_custom_call.1} parent=39 // pred_check
          %p311 = pneg %p87
        $region46: #{tpu_custom_call.1} parent=39 // pred_check_branch
          %313 = sbr.rel (%p311) target = $region48
        $region47: #{tpu_custom_call.1} parent=39 // pred_region
          %314 = dma.done %s307, 4096
        $region48: #{tpu_custom_call.1} parent=39 // pred_fallthru
          _
        // Predicated region
        $region49: #{tpu_custom_call.1} parent=39 // pred_check
          %p315 = pneg %p108
        $region50: #{tpu_custom_call.1} parent=39 // pred_check_branch
          %317 = sbr.rel (%p315) target = $region52
        $region51: #{tpu_custom_call.1} parent=39 // pred_region
          %318 = dma.done [#allocation8], 1024
        $region52: #{tpu_custom_call.1} parent=39 // pred_fallthru
          _
        %s319 = sand.u32 %s28, 1
        %s320 = scalar_lea.sflag [#allocation11], %s319
        %s321 = sand.u32 %s121, 1
        %s322 = smul.addr %s321, 128
        %s323 = scalar_lea.vmem [#allocation10], %s322
        // Predicated region
        $region53: #{tpu_custom_call.1} parent=39 // pred_check
          %p324 = pneg %p134
        $region54: #{tpu_custom_call.1} parent=39 // pred_check_branch
          %326 = sbr.rel (%p324) target = $region56
        $region55: #{tpu_custom_call.1} parent=39 // pred_region
          %327 = dma.done %s320, 2048
        $region56: #{tpu_custom_call.1} parent=39 // pred_fallthru
          _
        // Predicated region
        $region57: #{tpu_custom_call.1} parent=39 // pred_check
          %p328 = pneg %p155
        $region58: #{tpu_custom_call.1} parent=39 // pred_check_branch
          %330 = sbr.rel (%p328) target = $region60
        $region59: #{tpu_custom_call.1} parent=39 // pred_region
          %331 = dma.done [#allocation11], 1024
        $region60: #{tpu_custom_call.1} parent=39 // pred_fallthru
          _
        %s332 = sand.u32 %s48, 1
        %s333 = scalar_lea.sflag [#allocation5], %s332
        %s334 = sand.u32 %s48, 1
        %s335 = smul.addr %s334, 8
        %s336 = scalar_lea.vmem [#allocation4], %s335
        %p337 = pneg %p61
        %p338 = pneg %p58
        %s339 = sand.u32 %s28, 1
        %s340 = scalar_lea.sflag [#allocation8], %s339
        %s341 = sand.u32 %s74, 1
        %s342 = smul.addr %s341, 256
        %s343 = scalar_lea.vmem [#allocation7], %s342
        %p344 = pneg %p87
        %p345 = pneg %p84
        %p346 = pneg %p108
        %p347 = pneg %p105
        %s348 = sand.u32 %s28, 1
        %s349 = scalar_lea.sflag [#allocation11], %s348
        %s350 = sand.u32 %s121, 1
        %s351 = smul.addr %s350, 128
        %s352 = scalar_lea.vmem [#allocation10], %s351
        %p353 = pneg %p134
        %p354 = pneg %p131
        %p355 = pneg %p155
        %p356 = pneg %p152
        %p357 = pneg %p181
        %p358 = pneg %p178
        %s359 = sand.u32 %s168, 1
        %s360 = scalar_lea.sflag [#allocation6], %s359
        %s361 = sand.u32 %s168, 1
        %s362 = smul.addr %s361, 16
        %s363 = scalar_lea.vmem [#allocation13], %s362
        %s364 = smul.u32 2, %s32
        %s365 = smul.u32 2, %s33
        %s366 = smul.u32 16, %s33
        %s367 = smul.u32 2, %s32
        %p369 = scmp.eq.s32.totalorder %s33, 0
        // Predicated region
        $region61: #{tpu_custom_call.1} parent=39 // pred_check
          %p370 = pneg %p369
        $region62: #{tpu_custom_call.1} parent=39 // pred_check_branch
          %372 = sbr.rel (%p370) target = $region64
        $region63: #{tpu_custom_call.1} parent=39 // pred_region
          %373 = vst [vmem:[#allocation3] sm:$0xff] 0.0
          %374 = vst [vmem:[#allocation3 + $0x8] sm:$0xff] 0.0
          %375 = vst [vmem:[#allocation3 + $0x10] sm:$0xff] 0.0
          %376 = vst [vmem:[#allocation3 + $0x18] sm:$0xff] 0.0
          %v377 = vld [vmem:[%s301] sm:$0xf]
          %v378 = vld [vmem:[%s301 + $0x4] sm:$0xf]
          %v379 = vld [vmem:[#allocation9] sm:$0xf]
          %v380 = vld [vmem:[#allocation9 + $0x4] sm:$0xf]
          %v381 = vld [vmem:[#allocation9 + $0x8] sm:$0xf]
          %v382 = vld [vmem:[#allocation9 + $0xc] sm:$0xf]
          %v383 = vld [vmem:[#allocation9 + $0x10] sm:$0xf]
          %v384 = vld [vmem:[#allocation9 + $0x14] sm:$0xf]
          %v385 = vld [vmem:[#allocation9 + $0x18] sm:$0xf]
          %v386 = vld [vmem:[#allocation9 + $0x1c] sm:$0xf]
          %v387 = vld [vmem:[#allocation9 + $0x20] sm:$0xf]
          %v388 = vld [vmem:[#allocation9 + $0x24] sm:$0xf]
          %v389 = vld [vmem:[#allocation9 + $0x28] sm:$0xf]
          %v390 = vld [vmem:[#allocation9 + $0x2c] sm:$0xf]
          %v391 = vld [vmem:[#allocation9 + $0x30] sm:$0xf]
          %v392 = vld [vmem:[#allocation9 + $0x34] sm:$0xf]
          %v393 = vld [vmem:[#allocation9 + $0x38] sm:$0xf]
          %v394 = vld [vmem:[#allocation9 + $0x3c] sm:$0xf]
          %v397 = vunpack.c.l.b16 %v377
          %v398 = vunpack.c.l.b16 %v378
          %v399 = vpack.c.b16 %v398, %v397
          %v417 = vunpack.c.l.b16 %v379
          %v418 = vunpack.c.l.b16 %v380
          %v419 = vunpack.c.l.b16 %v381
          %v420 = vunpack.c.l.b16 %v382
          %v421 = vunpack.c.l.b16 %v383
          %v422 = vunpack.c.l.b16 %v384
          %v423 = vunpack.c.l.b16 %v385
          %v424 = vunpack.c.l.b16 %v386
          %v425 = vunpack.c.l.b16 %v387
          %v426 = vunpack.c.l.b16 %v388
          %v427 = vunpack.c.l.b16 %v389
          %v428 = vunpack.c.l.b16 %v390
          %v429 = vunpack.c.l.b16 %v391
          %v430 = vunpack.c.l.b16 %v392
          %v431 = vunpack.c.l.b16 %v393
          %v432 = vunpack.c.l.b16 %v394
          %v433 = vpack.c.b16 %v418, %v417
          %v434 = vpack.c.b16 %v420, %v419
          %v435 = vpack.c.b16 %v422, %v421
          %v436 = vpack.c.b16 %v424, %v423
          %v437 = vpack.c.b16 %v426, %v425
          %v438 = vpack.c.b16 %v428, %v427
          %v439 = vpack.c.b16 %v430, %v429
          %v440 = vpack.c.b16 %v432, %v431
          %449 = vmatprep.subr.bf16.mxu0 0
          %450 = vmatpush1.bf16.msra.mxu0 %v433
          %451 = vmatprep.subr.bf16.mxu0 0
          %452 = vmatpush1.bf16.msra.mxu0 %v434
          %453 = vmatprep.subr.bf16.mxu0 0
          %454 = vmatpush1.bf16.msra.mxu0 %v435
          %455 = vmatprep.subr.bf16.mxu0 0
          %456 = vmatpush1.bf16.msra.mxu0 %v436
          %457 = vmatprep.subr.bf16.mxu0 0
          %458 = vmatpush1.bf16.msra.mxu0 %v437
          %459 = vmatprep.subr.bf16.mxu0 0
          %460 = vmatpush1.bf16.msra.mxu0 %v438
          %461 = vmatprep.subr.bf16.mxu0 0
          %462 = vmatpush1.bf16.msra.mxu0 %v439
          %463 = vmatprep.subr.bf16.mxu0 0
          %464 = vmatpush1.bf16.msra.mxu0 %v440
          %465 = vmatprep.subr.bf16.mxu0 0
          %466 = vmatpush1.bf16.msra.mxu0 0
          %467 = vmatprep.subr.bf16.mxu0 0
          %468 = vmatpush1.bf16.msra.mxu0 0
          %469 = vmatprep.subr.bf16.mxu0 0
          %470 = vmatpush1.bf16.msra.mxu0 0
          %471 = vmatprep.subr.bf16.mxu0 0
          %472 = vmatpush1.bf16.msra.mxu0 0
          %473 = vmatprep.subr.bf16.mxu0 0
          %474 = vmatpush1.bf16.msra.mxu0 0
          %475 = vmatprep.subr.bf16.mxu0 0
          %476 = vmatpush1.bf16.msra.mxu0 0
          %477 = vmatprep.subr.bf16.mxu0 0
          %478 = vmatpush1.bf16.msra.mxu0 0
          %479 = vmatprep.subr.bf16.mxu0 0
          %480 = vmatpush1.bf16.msra.mxu0 0
          %481 = vmatprep.mubr.bf16.mxu0 0
          %482 = vmatmul.mubr.bf16.gmra.mrb[0].mxu0 %v399
          %v483 = vpop.f32.mrb[0].mxu0
          %v484 = vadd.f32 0.0, %v483
          %v485 = vpop.f32.mrb[0].mxu0
          %v486 = vpop.f32.mrb[0].mxu0
          %v487 = vadd.f32 0.0, %v486
          %v488 = vpop.f32.mrb[0].mxu0
          %489 = vdwg.mxu0
          %490 = vst [vmem:[#allocation2] sm:$0xff] %v399
          %v491 = vpack.c.bf16 %v487, %v484
          %492 = vst [vmem:[#allocation2 + $0x8] sm:$0xff] %v491
        $region64: #{tpu_custom_call.1} parent=39 // pred_fallthru
          _
        %v493 = vld [vmem:[#allocation2] sm:$0xff]
        %v494 = vld [vmem:[#allocation2 + $0x8] sm:$0xff]
        %v495 = vld [vmem:[%s310] sm:$0xff]
        %v496 = vld [vmem:[%s310 + $0x8] sm:$0xff]
        %v497 = vld [vmem:[%s310 + $0x10] sm:$0xff]
        %v498 = vld [vmem:[%s310 + $0x18] sm:$0xff]
        %v499 = vld [vmem:[%s310 + $0x20] sm:$0xff]
        %v500 = vld [vmem:[%s310 + $0x28] sm:$0xff]
        %v501 = vld [vmem:[%s310 + $0x30] sm:$0xff]
        %v502 = vld [vmem:[%s310 + $0x38] sm:$0xff]
        %v503 = vld [vmem:[%s310 + $0x40] sm:$0xff]
        %v504 = vld [vmem:[%s310 + $0x48] sm:$0xff]
        %v505 = vld [vmem:[%s310 + $0x50] sm:$0xff]
        %v506 = vld [vmem:[%s310 + $0x58] sm:$0xff]
        %v507 = vld [vmem:[%s310 + $0x60] sm:$0xff]
        %v508 = vld [vmem:[%s310 + $0x68] sm:$0xff]
        %v509 = vld [vmem:[%s310 + $0x70] sm:$0xff]
        %v510 = vld [vmem:[%s310 + $0x78] sm:$0xff]
        %v511 = vld [vmem:[%s310 + $0x80] sm:$0xff]
        %v512 = vld [vmem:[%s310 + $0x88] sm:$0xff]
        %v513 = vld [vmem:[%s310 + $0x90] sm:$0xff]
        %v514 = vld [vmem:[%s310 + $0x98] sm:$0xff]
        %v515 = vld [vmem:[%s310 + $0xa0] sm:$0xff]
        %v516 = vld [vmem:[%s310 + $0xa8] sm:$0xff]
        %v517 = vld [vmem:[%s310 + $0xb0] sm:$0xff]
        %v518 = vld [vmem:[%s310 + $0xb8] sm:$0xff]
        %v519 = vld [vmem:[%s310 + $0xc0] sm:$0xff]
        %v520 = vld [vmem:[%s310 + $0xc8] sm:$0xff]
        %v521 = vld [vmem:[%s310 + $0xd0] sm:$0xff]
        %v522 = vld [vmem:[%s310 + $0xd8] sm:$0xff]
        %v523 = vld [vmem:[%s310 + $0xe0] sm:$0xff]
        %v524 = vld [vmem:[%s310 + $0xe8] sm:$0xff]
        %v525 = vld [vmem:[%s310 + $0xf0] sm:$0xff]
        %v526 = vld [vmem:[%s310 + $0xf8] sm:$0xff]
        %v559 = vunpack.c.l.b16 %v495
        %v560 = vunpack.c.h.b16 %v495
        %v561 = vunpack.c.l.b16 %v496
        %v562 = vunpack.c.h.b16 %v496
        %v563 = vunpack.c.l.b16 %v497
        %v564 = vunpack.c.h.b16 %v497
        %v565 = vunpack.c.l.b16 %v498
        %v566 = vunpack.c.h.b16 %v498
        %v567 = vunpack.c.l.b16 %v499
        %v568 = vunpack.c.h.b16 %v499
        %v569 = vunpack.c.l.b16 %v500
        %v570 = vunpack.c.h.b16 %v500
        %v571 = vunpack.c.l.b16 %v501
        %v572 = vunpack.c.h.b16 %v501
        %v573 = vunpack.c.l.b16 %v502
        %v574 = vunpack.c.h.b16 %v502
        %v575 = vunpack.c.l.b16 %v503
        %v576 = vunpack.c.h.b16 %v503
        %v577 = vunpack.c.l.b16 %v504
        %v578 = vunpack.c.h.b16 %v504
        %v579 = vunpack.c.l.b16 %v505
        %v580 = vunpack.c.h.b16 %v505
        %v581 = vunpack.c.l.b16 %v506
        %v582 = vunpack.c.h.b16 %v506
        %v583 = vunpack.c.l.b16 %v507
        %v584 = vunpack.c.h.b16 %v507
        %v585 = vunpack.c.l.b16 %v508
        %v586 = vunpack.c.h.b16 %v508
        %v587 = vunpack.c.l.b16 %v509
        %v588 = vunpack.c.h.b16 %v509
        %v589 = vunpack.c.l.b16 %v510
        %v590 = vunpack.c.h.b16 %v510
        %v591 = vunpack.c.l.b16 %v511
        %v592 = vunpack.c.h.b16 %v511
        %v593 = vunpack.c.l.b16 %v512
        %v594 = vunpack.c.h.b16 %v512
        %v595 = vunpack.c.l.b16 %v513
        %v596 = vunpack.c.h.b16 %v513
        %v597 = vunpack.c.l.b16 %v514
        %v598 = vunpack.c.h.b16 %v514
        %v599 = vunpack.c.l.b16 %v515
        %v600 = vunpack.c.h.b16 %v515
        %v601 = vunpack.c.l.b16 %v516
        %v602 = vunpack.c.h.b16 %v516
        %v603 = vunpack.c.l.b16 %v517
        %v604 = vunpack.c.h.b16 %v517
        %v605 = vunpack.c.l.b16 %v518
        %v606 = vunpack.c.h.b16 %v518
        %v607 = vunpack.c.l.b16 %v519
        %v608 = vunpack.c.h.b16 %v519
        %v609 = vunpack.c.l.b16 %v520
        %v610 = vunpack.c.h.b16 %v520
        %v611 = vunpack.c.l.b16 %v521
        %v612 = vunpack.c.h.b16 %v521
        %v613 = vunpack.c.l.b16 %v522
        %v614 = vunpack.c.h.b16 %v522
        %v615 = vunpack.c.l.b16 %v523
        %v616 = vunpack.c.h.b16 %v523
        %v617 = vunpack.c.l.b16 %v524
        %v618 = vunpack.c.h.b16 %v524
        %v619 = vunpack.c.l.b16 %v525
        %v620 = vunpack.c.h.b16 %v525
        %v621 = vunpack.c.l.b16 %v526
        %v622 = vunpack.c.h.b16 %v526
        %v623 = vpack.c.b16 %v561, %v559
        %v624 = vpack.c.b16 %v562, %v560
        %v625 = vpack.c.b16 %v565, %v563
        %v626 = vpack.c.b16 %v566, %v564
        %v627 = vpack.c.b16 %v569, %v567
        %v628 = vpack.c.b16 %v570, %v568
        %v629 = vpack.c.b16 %v573, %v571
        %v630 = vpack.c.b16 %v574, %v572
        %v631 = vpack.c.b16 %v577, %v575
        %v632 = vpack.c.b16 %v578, %v576
        %v633 = vpack.c.b16 %v581, %v579
        %v634 = vpack.c.b16 %v582, %v580
        %v635 = vpack.c.b16 %v585, %v583
        %v636 = vpack.c.b16 %v586, %v584
        %v637 = vpack.c.b16 %v589, %v587
        %v638 = vpack.c.b16 %v590, %v588
        %v639 = vpack.c.b16 %v593, %v591
        %v640 = vpack.c.b16 %v594, %v592
        %v641 = vpack.c.b16 %v597, %v595
        %v642 = vpack.c.b16 %v598, %v596
        %v643 = vpack.c.b16 %v601, %v599
        %v644 = vpack.c.b16 %v602, %v600
        %v645 = vpack.c.b16 %v605, %v603
        %v646 = vpack.c.b16 %v606, %v604
        %v647 = vpack.c.b16 %v609, %v607
        %v648 = vpack.c.b16 %v610, %v608
        %v649 = vpack.c.b16 %v613, %v611
        %v650 = vpack.c.b16 %v614, %v612
        %v651 = vpack.c.b16 %v617, %v615
        %v652 = vpack.c.b16 %v618, %v616
        %v653 = vpack.c.b16 %v621, %v619
        %v654 = vpack.c.b16 %v622, %v620
        %687 = vmatprep.subr.bf16.mxu0 %v624
        %688 = vmatpush1.bf16.msra.mxu0 %v623
        %689 = vmatprep.subr.bf16.mxu0 %v626
        %690 = vmatpush1.bf16.msra.mxu0 %v625
        %691 = vmatprep.subr.bf16.mxu0 %v628
        %692 = vmatpush1.bf16.msra.mxu0 %v627
        %693 = vmatprep.subr.bf16.mxu0 %v630
        %694 = vmatpush1.bf16.msra.mxu0 %v629
        %695 = vmatprep.subr.bf16.mxu0 %v632
        %696 = vmatpush1.bf16.msra.mxu0 %v631
        %697 = vmatprep.subr.bf16.mxu0 %v634
        %698 = vmatpush1.bf16.msra.mxu0 %v633
        %699 = vmatprep.subr.bf16.mxu0 %v636
        %700 = vmatpush1.bf16.msra.mxu0 %v635
        %701 = vmatprep.subr.bf16.mxu0 %v638
        %702 = vmatpush1.bf16.msra.mxu0 %v637
        %703 = vmatprep.subr.bf16.mxu0 %v640
        %704 = vmatpush1.bf16.msra.mxu0 %v639
        %705 = vmatprep.subr.bf16.mxu0 %v642
        %706 = vmatpush1.bf16.msra.mxu0 %v641
        %707 = vmatprep.subr.bf16.mxu0 %v644
        %708 = vmatpush1.bf16.msra.mxu0 %v643
        %709 = vmatprep.subr.bf16.mxu0 %v646
        %710 = vmatpush1.bf16.msra.mxu0 %v645
        %711 = vmatprep.subr.bf16.mxu0 %v648
        %712 = vmatpush1.bf16.msra.mxu0 %v647
        %713 = vmatprep.subr.bf16.mxu0 %v650
        %714 = vmatpush1.bf16.msra.mxu0 %v649
        %715 = vmatprep.subr.bf16.mxu0 %v652
        %716 = vmatpush1.bf16.msra.mxu0 %v651
        %717 = vmatprep.subr.bf16.mxu0 %v654
        %718 = vmatpush1.bf16.msra.mxu0 %v653
        %719 = vmatprep.mubr.bf16.mxu0 %v494
        %720 = vmatmul.mubr.bf16.gmra.mrb[0].mxu0 %v493
        %v721 = vpop.f32.mrb[0].mxu0
        %v722 = vadd.f32 0.0, %v721
        %v723 = vpop.f32.mrb[0].mxu0
        %v724 = vadd.f32 0.0, %v723
        %v725 = vpop.f32.mrb[0].mxu0
        %v726 = vadd.f32 0.0, %v725
        %v727 = vpop.f32.mrb[0].mxu0
        %v728 = vadd.f32 0.0, %v727
        %729 = vdwg.mxu0
        %v730 = vxor.u32 %v722, 2147483648
        %v731 = vxor.u32 %v726, 2147483648
        %v732 = vmul.f32 %v730, 1.442695
        %v733 = vpow.pop %v732
        %v734 = vmul.f32 %v731, 1.442695
        %v735 = vpow.pop %v734
        %v736 = vadd.f32 %v733, 1.0
        %v737 = vadd.f32 %v735, 1.0
        %v738 = vrcp.pop %v736
        %v739 = vmul.f32 1.0, %v738
        %v740 = vrcp.pop %v737
        %v741 = vmul.f32 1.0, %v740
        %v742 = vmul.f32 %v722, %v739
        %v743 = vmul.f32 %v726, %v741
        %v744 = vmul.f32 %v742, %v724
        %v745 = vmul.f32 %v743, %v728
        %v746 = vpack.c.bf16 %v745, %v744
        %v747 = vld [vmem:[#allocation3] sm:$0xff]
        %v748 = vld [vmem:[#allocation3 + $0x8] sm:$0xff]
        %v749 = vld [vmem:[#allocation3 + $0x10] sm:$0xff]
        %v750 = vld [vmem:[#allocation3 + $0x18] sm:$0xff]
        %v751 = vld [vmem:[%s323] sm:$0xff]
        %v752 = vld [vmem:[%s323 + $0x8] sm:$0xff]
        %v753 = vld [vmem:[%s323 + $0x10] sm:$0xff]
        %v754 = vld [vmem:[%s323 + $0x18] sm:$0xff]
        %v755 = vld [vmem:[%s323 + $0x20] sm:$0xff]
        %v756 = vld [vmem:[%s323 + $0x28] sm:$0xff]
        %v757 = vld [vmem:[%s323 + $0x30] sm:$0xff]
        %v758 = vld [vmem:[%s323 + $0x38] sm:$0xff]
        %v759 = vld [vmem:[%s323 + $0x40] sm:$0xff]
        %v760 = vld [vmem:[%s323 + $0x48] sm:$0xff]
        %v761 = vld [vmem:[%s323 + $0x50] sm:$0xff]
        %v762 = vld [vmem:[%s323 + $0x58] sm:$0xff]
        %v763 = vld [vmem:[%s323 + $0x60] sm:$0xff]
        %v764 = vld [vmem:[%s323 + $0x68] sm:$0xff]
        %v765 = vld [vmem:[%s323 + $0x70] sm:$0xff]
        %v766 = vld [vmem:[%s323 + $0x78] sm:$0xff]
        %v783 = vunpack.c.l.b16 %v751
        %v784 = vunpack.c.h.b16 %v751
        %v785 = vunpack.c.l.b16 %v752
        %v786 = vunpack.c.h.b16 %v752
        %v787 = vunpack.c.l.b16 %v753
        %v788 = vunpack.c.h.b16 %v753
        %v789 = vunpack.c.l.b16 %v754
        %v790 = vunpack.c.h.b16 %v754
        %v791 = vunpack.c.l.b16 %v755
        %v792 = vunpack.c.h.b16 %v755
        %v793 = vunpack.c.l.b16 %v756
        %v794 = vunpack.c.h.b16 %v756
        %v795 = vunpack.c.l.b16 %v757
        %v796 = vunpack.c.h.b16 %v757
        %v797 = vunpack.c.l.b16 %v758
        %v798 = vunpack.c.h.b16 %v758
        %v799 = vunpack.c.l.b16 %v759
        %v800 = vunpack.c.h.b16 %v759
        %v801 = vunpack.c.l.b16 %v760
        %v802 = vunpack.c.h.b16 %v760
        %v803 = vunpack.c.l.b16 %v761
        %v804 = vunpack.c.h.b16 %v761
        %v805 = vunpack.c.l.b16 %v762
        %v806 = vunpack.c.h.b16 %v762
        %v807 = vunpack.c.l.b16 %v763
        %v808 = vunpack.c.h.b16 %v763
        %v809 = vunpack.c.l.b16 %v764
        %v810 = vunpack.c.h.b16 %v764
        %v811 = vunpack.c.l.b16 %v765
        %v812 = vunpack.c.h.b16 %v765
        %v813 = vunpack.c.l.b16 %v766
        %v814 = vunpack.c.h.b16 %v766
        %v815 = vpack.c.b16 %v785, %v783
        %v816 = vpack.c.b16 %v786, %v784
        %v817 = vpack.c.b16 %v789, %v787
        %v818 = vpack.c.b16 %v790, %v788
        %v819 = vpack.c.b16 %v793, %v791
        %v820 = vpack.c.b16 %v794, %v792
        %v821 = vpack.c.b16 %v797, %v795
        %v822 = vpack.c.b16 %v798, %v796
        %v823 = vpack.c.b16 %v801, %v799
        %v824 = vpack.c.b16 %v802, %v800
        %v825 = vpack.c.b16 %v805, %v803
        %v826 = vpack.c.b16 %v806, %v804
        %v827 = vpack.c.b16 %v809, %v807
        %v828 = vpack.c.b16 %v810, %v808
        %v829 = vpack.c.b16 %v813, %v811
        %v830 = vpack.c.b16 %v814, %v812
        %847 = vmatprep.subr.bf16.mxu0 %v816
        %848 = vmatpush1.bf16.msra.mxu0 %v815
        %849 = vmatprep.subr.bf16.mxu0 %v818
        %850 = vmatpush1.bf16.msra.mxu0 %v817
        %851 = vmatprep.subr.bf16.mxu0 %v820
        %852 = vmatpush1.bf16.msra.mxu0 %v819
        %853 = vmatprep.subr.bf16.mxu0 %v822
        %854 = vmatpush1.bf16.msra.mxu0 %v821
        %855 = vmatprep.subr.bf16.mxu0 %v824
        %856 = vmatpush1.bf16.msra.mxu0 %v823
        %857 = vmatprep.subr.bf16.mxu0 %v826
        %858 = vmatpush1.bf16.msra.mxu0 %v825
        %859 = vmatprep.subr.bf16.mxu0 %v828
        %860 = vmatpush1.bf16.msra.mxu0 %v827
        %861 = vmatprep.subr.bf16.mxu0 %v830
        %862 = vmatpush1.bf16.msra.mxu0 %v829
        %863 = vmatprep.subr.bf16.mxu0 0
        %864 = vmatpush1.bf16.msra.mxu0 0
        %865 = vmatprep.subr.bf16.mxu0 0
        %866 = vmatpush1.bf16.msra.mxu0 0
        %867 = vmatprep.subr.bf16.mxu0 0
        %868 = vmatpush1.bf16.msra.mxu0 0
        %869 = vmatprep.subr.bf16.mxu0 0
        %870 = vmatpush1.bf16.msra.mxu0 0
        %871 = vmatprep.subr.bf16.mxu0 0
        %872 = vmatpush1.bf16.msra.mxu0 0
        %873 = vmatprep.subr.bf16.mxu0 0
        %874 = vmatpush1.bf16.msra.mxu0 0
        %875 = vmatprep.subr.bf16.mxu0 0
        %876 = vmatpush1.bf16.msra.mxu0 0
        %877 = vmatprep.subr.bf16.mxu0 0
        %878 = vmatpush1.bf16.msra.mxu0 0
        %879 = vmatprep.mubr.bf16.mxu0 0
        %880 = vmatmul.mubr.bf16.gmra.mrb[0].mxu0 %v746
        %v881 = vpop.f32.mrb[0].mxu0
        %v882 = vadd.f32 0.0, %v881
        %v883 = vpop.f32.mrb[0].mxu0
        %v884 = vadd.f32 0.0, %v883
        %v885 = vpop.f32.mrb[0].mxu0
        %v886 = vadd.f32 0.0, %v885
        %v887 = vpop.f32.mrb[0].mxu0
        %v888 = vadd.f32 0.0, %v887
        %889 = vdwg.mxu0
        %v890 = vadd.f32 %v747, %v882
        %v891 = vadd.f32 %v748, %v884
        %v892 = vadd.f32 %v749, %v886
        %v893 = vadd.f32 %v750, %v888
        %894 = vst [vmem:[#allocation3] sm:$0xff] %v890
        %895 = vst [vmem:[#allocation3 + $0x8] sm:$0xff] %v891
        %896 = vst [vmem:[#allocation3 + $0x10] sm:$0xff] %v892
        %897 = vst [vmem:[#allocation3 + $0x18] sm:$0xff] %v893
        %p898 = scmp.eq.s32.totalorder %s33, 1
        // Predicated region
        $region65: #{tpu_custom_call.1} parent=39 // pred_check
          %p899 = pneg %p898
        $region66: #{tpu_custom_call.1} parent=39 // pred_check_branch
          %901 = sbr.rel (%p899) target = $region68
        $region67: #{tpu_custom_call.1} parent=39 // pred_region
          %v902 = vld [vmem:[#allocation3] sm:$0xff]
          %v903 = vld [vmem:[#allocation3 + $0x8] sm:$0xff]
          %v904 = vld [vmem:[#allocation3 + $0x10] sm:$0xff]
          %v905 = vld [vmem:[#allocation3 + $0x18] sm:$0xff]
          %v906 = vld [vmem:[#allocation12] sm:$0xf]
          %v907 = vld [vmem:[#allocation12 + $0x4] sm:$0xf]
          %v908 = vld [vmem:[#allocation12 + $0x8] sm:$0xf]
          %v909 = vld [vmem:[#allocation12 + $0xc] sm:$0xf]
          %v910 = vld [vmem:[#allocation12 + $0x10] sm:$0xf]
          %v911 = vld [vmem:[#allocation12 + $0x14] sm:$0xf]
          %v912 = vld [vmem:[#allocation12 + $0x18] sm:$0xf]
          %v913 = vld [vmem:[#allocation12 + $0x1c] sm:$0xf]
          %v914 = vld [vmem:[#allocation12 + $0x20] sm:$0xf]
          %v915 = vld [vmem:[#allocation12 + $0x24] sm:$0xf]
          %v916 = vld [vmem:[#allocation12 + $0x28] sm:$0xf]
          %v917 = vld [vmem:[#allocation12 + $0x2c] sm:$0xf]
          %v918 = vld [vmem:[#allocation12 + $0x30] sm:$0xf]
          %v919 = vld [vmem:[#allocation12 + $0x34] sm:$0xf]
          %v920 = vld [vmem:[#allocation12 + $0x38] sm:$0xf]
          %v921 = vld [vmem:[#allocation12 + $0x3c] sm:$0xf]
          %v922 = vunpack.c.l.bf16 %v906
          %v923 = vunpack.c.l.bf16 %v907
          %v924 = vunpack.c.l.bf16 %v908
          %v925 = vunpack.c.l.bf16 %v909
          %v926 = vunpack.c.l.bf16 %v910
          %v927 = vunpack.c.l.bf16 %v911
          %v928 = vunpack.c.l.bf16 %v912
          %v929 = vunpack.c.l.bf16 %v913
          %v930 = vunpack.c.l.bf16 %v914
          %v931 = vunpack.c.l.bf16 %v915
          %v932 = vunpack.c.l.bf16 %v916
          %v933 = vunpack.c.l.bf16 %v917
          %v934 = vunpack.c.l.bf16 %v918
          %v935 = vunpack.c.l.bf16 %v919
          %v936 = vunpack.c.l.bf16 %v920
          %v937 = vunpack.c.l.bf16 %v921
          %938 = vmatprep.subr.mxu0 0.0
          %939 = vmatpush1.msra.mxu0 %v922
          %940 = vmatprep.subr.mxu0 0.0
          %941 = vmatpush1.msra.mxu0 %v923
          %942 = vmatprep.subr.mxu0 0.0
          %943 = vmatpush1.msra.mxu0 %v924
          %944 = vmatprep.subr.mxu0 0.0
          %945 = vmatpush1.msra.mxu0 %v925
          %946 = vmatprep.subr.mxu0 0.0
          %947 = vmatpush1.msra.mxu0 %v926
          %948 = vmatprep.subr.mxu0 0.0
          %949 = vmatpush1.msra.mxu0 %v927
          %950 = vmatprep.subr.mxu0 0.0
          %951 = vmatpush1.msra.mxu0 %v928
          %952 = vmatprep.subr.mxu0 0.0
          %953 = vmatpush1.msra.mxu0 %v929
          %954 = vmatprep.subr.mxu0 0.0
          %955 = vmatpush1.msra.mxu0 %v930
          %956 = vmatprep.subr.mxu0 0.0
          %957 = vmatpush1.msra.mxu0 %v931
          %958 = vmatprep.subr.mxu0 0.0
          %959 = vmatpush1.msra.mxu0 %v932
          %960 = vmatprep.subr.mxu0 0.0
          %961 = vmatpush1.msra.mxu0 %v933
          %962 = vmatprep.subr.mxu0 0.0
          %963 = vmatpush1.msra.mxu0 %v934
          %964 = vmatprep.subr.mxu0 0.0
          %965 = vmatpush1.msra.mxu0 %v935
          %966 = vmatprep.subr.mxu0 0.0
          %967 = vmatpush1.msra.mxu0 %v936
          %968 = vmatprep.subr.mxu0 0.0
          %969 = vmatpush1.msra.mxu0 %v937
          %970 = vmatprep.subr.mxu0 0.0
          %971 = vmatpush1.msra.mxu0 0.0
          %972 = vmatprep.subr.mxu0 0.0
          %973 = vmatpush1.msra.mxu0 0.0
          %974 = vmatprep.subr.mxu0 0.0
          %975 = vmatpush1.msra.mxu0 0.0
          %976 = vmatprep.subr.mxu0 0.0
          %977 = vmatpush1.msra.mxu0 0.0
          %978 = vmatprep.subr.mxu0 0.0
          %979 = vmatpush1.msra.mxu0 0.0
          %980 = vmatprep.subr.mxu0 0.0
          %981 = vmatpush1.msra.mxu0 0.0
          %982 = vmatprep.subr.mxu0 0.0
          %983 = vmatpush1.msra.mxu0 0.0
          %984 = vmatprep.subr.mxu0 0.0
          %985 = vmatpush1.msra.mxu0 0.0
          %986 = vmatprep.subr.mxu0 0.0
          %987 = vmatpush1.msra.mxu0 0.0
          %988 = vmatprep.subr.mxu0 0.0
          %989 = vmatpush1.msra.mxu0 0.0
          %990 = vmatprep.subr.mxu0 0.0
          %991 = vmatpush1.msra.mxu0 0.0
          %992 = vmatprep.subr.mxu0 0.0
          %993 = vmatpush1.msra.mxu0 0.0
          %994 = vmatprep.subr.mxu0 0.0
          %995 = vmatpush1.msra.mxu0 0.0
          %996 = vmatprep.subr.mxu0 0.0
          %997 = vmatpush1.msra.mxu0 0.0
          %998 = vmatprep.subr.mxu0 0.0
          %999 = vmatpush1.msra.mxu0 0.0
          %1000 = vmatprep.subr.mxu0 0.0
          %1001 = vmatpush1.msra.mxu0 0.0
          %1002 = vmatprep.mubr.f32.mxu0 0.0
          %1003 = vmatmul.mubr.f32.gmra.mrb[0].mxu0 %v903
          %v1004 = vpop.f32.mrb[0].mxu0
          %v1005 = vadd.f32 0.0, %v1004
          %v1006 = vpop.f32.mrb[0].mxu0
          %1007 = vmatprep.mubr.f32.mxu0 0.0
          %1008 = vmatmul.mubr.f32.gmra.mrb[0].mxu0 %v905
          %v1009 = vpop.f32.mrb[0].mxu0
          %v1010 = vadd.f32 0.0, %v1009
          %v1011 = vpop.f32.mrb[0].mxu0
          %1012 = vdwg.mxu0
          %v1013 = vadd.f32 %v902, %v1005
          %v1014 = vadd.f32 %v904, %v1010
          %1015 = vst [vmem:[%s363] sm:$0xff] %v1013
          %1016 = vst [vmem:[%s363 + $0x8] sm:$0xff] %v1014
        $region68: #{tpu_custom_call.1} parent=39 // pred_fallthru
          _
        %s1017 = sand.u32 %s168, 1
        %s1018 = scalar_lea.sflag [#allocation6], %s1017
        %s1019 = sand.u32 %s168, 1
        %s1020 = smul.addr %s1019, 16
        %s1021 = scalar_lea.vmem [#allocation13], %s1020
        // Predicated region
        $region69: #{tpu_custom_call.1} parent=39 // pred_check
          %p1022 = pneg %p178
        $region70: #{tpu_custom_call.1} parent=39 // pred_check_branch
          %1024 = sbr.rel (%p1022) target = $region72
        $region71: #{tpu_custom_call.1} parent=39 // pred_region
          %s1025 = smul.u32 2, %s32
          %s1027 = ssub.s32 256, 256
          %1028 = vsyncadd %s1018, %s1027
          %s1029 = smul.addr %s1025, 128
          %s1030 = scalar_lea.hbm %s5, %s1029
          %s1031 = sshll.u32 %s1021, 4
          %s1032 = int_to_ptr.vmem [resolvable:$true] %s1031
          %1037 = dma.vmem_to_hbm [thread:$0]  %s1032, 256, %s1030, %s1018, 128, 128, 8
        $region72: #{tpu_custom_call.1} parent=39 // pred_fallthru
          _
      $region40: #{tpu_custom_call.1} parent=5 // pred_fallthru
        _
      %p1038 = scmp.le.s32.totalorder 2, %s23
      // Predicated region
      $region73: #{tpu_custom_call.1} parent=5 // pred_check
        %p1039 = pneg %p1038
      $region74: #{tpu_custom_call.1} parent=5 // pred_check_branch
        %1041 = sbr.rel (%p1039) target = $region76
      $region75: #{tpu_custom_call.1} parent=5 // pred_region
        %s1042 = ssub.s32 %s23, 2
        // Predicated region
        $region77: #{tpu_custom_call.1} parent=75 // pred_check
          %p1043 = pneg %p184
        $region78: #{tpu_custom_call.1} parent=75 // pred_check_branch
          %1045 = sbr.rel (%p1043) target = $region80
        $region79: #{tpu_custom_call.1} parent=75 // pred_region
          %s1046 = sand.u32 %s169, 1
          %s1047 = scalar_lea.sflag [#allocation6], %s1046
          %s1048 = sand.u32 %s169, 1
          %s1049 = smul.addr %s1048, 16
          %s1050 = scalar_lea.vmem [#allocation13], %s1049
          %1051 = dma.done %s1047, 256
        $region80: #{tpu_custom_call.1} parent=75 // pred_fallthru
          _
      $region76: #{tpu_custom_call.1} parent=5 // pred_fallthru
        _
    $region6: #{tpu_custom_call.1} parent=1 // loop_footer
      %s27 = sadd.s32 1, %s23
    $region7: #{tpu_custom_call.1} parent=1 // loop_footer_branch
      %22 = sbr.rel target = $region3
    $region8: #{tpu_custom_call.1} parent=1 // loop_exit
      _
    %1052 = vsyncpa [#allocation5], 1
    %s1053 = scalar_lea.sflag [#allocation5], 1
    %1054 = vsyncpa %s1053, 1
    %1055 = vsyncpa [#allocation8], 1
    %s1056 = scalar_lea.sflag [#allocation8], 1
    %1057 = vsyncpa %s1056, 1
    %1058 = vsyncpa [#allocation11], 1
    %s1059 = scalar_lea.sflag [#allocation11], 1
    %1060 = vsyncpa %s1059, 1
    %1061 = vsyncpa [#allocation6], 1
    %s1062 = scalar_lea.sflag [#allocation6], 1
    %1063 = vsyncpa %s1062, 1

</llo_original>
